<compile_context>
chip_gen: v7x
topology: tpu7x:2x2x1
jax: 0.10.0
libtpu: 0.0.40
codegen_flags: <defaults>
</compile_context>

<pallas_src>
import math

import jax
import jax.numpy as jnp
from jax.experimental import pallas as pl
from jax.experimental.pallas import tpu as pltpu


def _make_divisible(v, divisor, width=1, min_value=None):
    if min_value is None:
        min_value = divisor
    new_v = max(min_value, int(v + divisor / 2) // divisor * divisor)
    if new_v < 0.9 * v:
        new_v += divisor
    return new_v


def _se_kernel(x_ref, w1t_ref, w2t_ref, o_ref):
    # x_ref:   (TB, C, HW)  batch tile, spatial flattened onto the lane axis
    # w1t_ref: (C, R)       conv_reduce weight, pre-transposed
    # w2t_ref: (R, C)       conv_expand weight, pre-transposed
    x = x_ref[...]
    xf = x.astype(jnp.float32)

    # Global average pool over spatial (lane) axis, accumulated in f32.
    pooled = jnp.mean(xf, axis=-1)                                # (TB, C)

    # conv_reduce (1x1, no bias) + ReLU, batched over the tile.
    h = jnp.dot(pooled, w1t_ref[...],
                preferred_element_type=jnp.float32)               # (TB, R)
    h = jnp.maximum(h, 0.0)

    # conv_expand (1x1, no bias).
    g = jnp.dot(h, w2t_ref[...],
                preferred_element_type=jnp.float32)               # (TB, C)

    # hardswish gate: g * relu6(g + 3) / 6
    gate = g * jnp.clip(g + 3.0, 0.0, 6.0) * (1.0 / 6.0)          # (TB, C)

    # Scale input, broadcasting the gate over the spatial axis.
    o_ref[...] = (xf * gate[:, :, None]).astype(o_ref.dtype)


def _vmem_capacity_bytes():
    try:
        return int(pltpu.get_tpu_info().vmem_capacity_bytes)
    except Exception:
        return 64 << 20   # conservative: v7x per-TensorCore VMEM


def _choose_batch_tile(N, C, HW, itemsize, tile_budget_bytes):
    """Largest TB whose (TB, C, HW) tile fits the budget, keeping >=2 grid steps."""
    per_batch = C * HW * itemsize
    tb = max(1, tile_budget_bytes // per_batch)
    if N > 1:
        # Keep at least 2 tiles so the parallel grid axis can shard across
        # v7x's two TensorCores.
        tb = min(tb, pl.cdiv(N, 2))
    return min(tb, N)


def squeeze_excite(x_nchw, w_reduce, w_expand):
    """x_nchw: (N, C, H, W); w_reduce: (R, C); w_expand: (C, R)."""
    N, C, H, W = x_nchw.shape
    HW = H * W
    R = w_reduce.shape[0]

    x = x_nchw.reshape(N, C, HW)
    w1t = jnp.transpose(w_reduce)          # (C, R)
    w2t = jnp.transpose(w_expand)          # (R, C)

    itemsize = jnp.dtype(x.dtype).itemsize
    vmem_cap = _vmem_capacity_bytes()
    # Scoped VMEM limit: 3/4 of physical (48 MiB on v7x, 96 MiB on v5e/v6e).
    vmem_limit = (vmem_cap * 3) // 4
    # 2x(in) + 2x(out) double-buffered tiles + headroom -> per-tile budget.
    tile_budget = vmem_limit // 8
    tb = _choose_batch_tile(N, C, HW, itemsize, tile_budget)

    out = pl.pallas_call(
        _se_kernel,
        out_shape=jax.ShapeDtypeStruct((N, C, HW), x.dtype),
        grid_spec=pltpu.PrefetchScalarGridSpec(
            num_scalar_prefetch=0,
            grid=(pl.cdiv(N, tb),),
            in_specs=[
                pl.BlockSpec((tb, C, HW), lambda n: (n, 0, 0)),
                pl.BlockSpec((C, R), lambda n: (0, 0)),
                pl.BlockSpec((R, C), lambda n: (0, 0)),
            ],
            out_specs=pl.BlockSpec((tb, C, HW), lambda n: (n, 0, 0)),
        ),
        compiler_params=pltpu.CompilerParams(
            dimension_semantics=("parallel",),
            vmem_limit_bytes=int(vmem_limit),
        ),
    )(x, w1t, w2t)
    return out.reshape(N, C, H, W)


def _reference(x, w_reduce, w_expand):
    # Pure-JAX reference mirroring the PyTorch forward.
    pooled = jnp.mean(x, axis=(2, 3))                         # (N, C)
    h = jnp.maximum(pooled @ w_reduce.T, 0.0)                 # (N, R)
    g = h @ w_expand.T                                        # (N, C)
    gate = g * jnp.clip(g + 3.0, 0.0, 6.0) / 6.0              # hardswish
    return x * gate[:, :, None, None]


if __name__ == "__main__":
    # Small shapes consistent with the module: in_chs=4, se_ratio=0.1, divisor=4.
    N, C, H, W = 2, 4, 16, 16
    se_ratio, divisor = 0.1, 4
    R = _make_divisible(C * se_ratio, divisor)                # reduced_chs

    key = jax.random.PRNGKey(0)
    kx, k1, k2 = jax.random.split(key, 3)
    x = jax.random.normal(kx, (N, C, H, W), dtype=jnp.float32)

    # Deterministic Conv2d-style (kaiming-uniform-ish) weight init.
    b1 = 1.0 / math.sqrt(C)
    b2 = 1.0 / math.sqrt(R)
    w_reduce = jax.random.uniform(k1, (R, C), jnp.float32, -b1, b1)   # conv_reduce.weight[:, :, 0, 0]
    w_expand = jax.random.uniform(k2, (C, R), jnp.float32, -b2, b2)   # conv_expand.weight[:, :, 0, 0]

    out = squeeze_excite(x, w_reduce, w_expand)
    out = jax.block_until_ready(out)

    ref = _reference(x, w_reduce, w_expand)
    assert out.shape == (N, C, H, W)
    assert jnp.allclose(out, ref, atol=1e-5, rtol=1e-5), "mismatch vs reference"

    print("KERNEL_OK")
</pallas_src>

<mosaic_0001>
module attributes {stable_mosaic.version = 11 : i64} {
  func.func @_se_kernel(%arg0: i32, %arg1: memref<1x4x256xf32, #tpu.memory_space<vmem>>, %arg2: memref<4x4xf32, #tpu.memory_space<vmem>>, %arg3: memref<4x4xf32, #tpu.memory_space<vmem>>, %arg4: memref<1x4x256xf32, #tpu.memory_space<vmem>>) attributes {dimension_semantics = [#tpu.dimension_semantics<parallel>], iteration_bounds = array<i64: 2>, scalar_prefetch = 0 : i64, scratch_operands = 0 : i64, tpu.core_type = #tpu.core_type<tc>, window_params = [{transform_indices = @transform_0, window_bounds = array<i64: 1, 4, 256>}, {pipeline_mode = #tpu.pipeline_mode<synchronous>, transform_indices = @transform_1, window_bounds = array<i64: 4, 4>}, {pipeline_mode = #tpu.pipeline_mode<synchronous>, transform_indices = @transform_2, window_bounds = array<i64: 4, 4>}, {transform_indices = @transform_3, window_bounds = array<i64: 1, 4, 256>}]} {
    %c0 = arith.constant 0 : index
    %c0_0 = arith.constant 0 : index
    %c0_1 = arith.constant 0 : index
    %0 = vector.load %arg1[%c0, %c0_0, %c0_1] : memref<1x4x256xf32, #tpu.memory_space<vmem>>, vector<1x4x256xf32>
    %cst = arith.constant dense<0.000000e+00> : vector<1x4xf32>
    %1 = vector.multi_reduction <add>, %0, %cst [2] : vector<1x4x256xf32> to vector<1x4xf32>
    %cst_2 = arith.constant 2.560000e+02 : f32
    %2 = vector.broadcast %cst_2 : f32 to vector<1x4xf32>
    %3 = arith.divf %1, %2 : vector<1x4xf32>
    %c0_3 = arith.constant 0 : index
    %c0_4 = arith.constant 0 : index
    %4 = vector.load %arg2[%c0_3, %c0_4] : memref<4x4xf32, #tpu.memory_space<vmem>>, vector<4x4xf32>
    %cst_5 = arith.constant dense<0.000000e+00> : vector<1x4xf32>
    %5 = tpu.matmul %3, %4, %cst_5 {dimension_numbers = #tpu.dot_dimension_numbers<[1], [0], [0], [1], [0, 0, 1, 1], [], []>} : vector<1x4xf32>, vector<4x4xf32>, vector<1x4xf32> -> vector<1x4xf32>
    %cst_6 = arith.constant 0.000000e+00 : f32
    %6 = vector.broadcast %cst_6 : f32 to vector<1x4xf32>
    %7 = arith.maximumf %5, %6 : vector<1x4xf32>
    %c0_7 = arith.constant 0 : index
    %c0_8 = arith.constant 0 : index
    %8 = vector.load %arg3[%c0_7, %c0_8] : memref<4x4xf32, #tpu.memory_space<vmem>>, vector<4x4xf32>
    %cst_9 = arith.constant dense<0.000000e+00> : vector<1x4xf32>
    %9 = tpu.matmul %7, %8, %cst_9 {dimension_numbers = #tpu.dot_dimension_numbers<[1], [0], [0], [1], [0, 0, 1, 1], [], []>} : vector<1x4xf32>, vector<4x4xf32>, vector<1x4xf32> -> vector<1x4xf32>
    %cst_10 = arith.constant 3.000000e+00 : f32
    %10 = vector.broadcast %cst_10 : f32 to vector<1x4xf32>
    %11 = arith.addf %9, %10 : vector<1x4xf32>
    %cst_11 = arith.constant 0.000000e+00 : f32
    %cst_12 = arith.constant 6.000000e+00 : f32
    %12 = vector.broadcast %cst_11 : f32 to vector<1x4xf32>
    %13 = arith.maximumf %12, %11 : vector<1x4xf32>
    %14 = vector.broadcast %cst_12 : f32 to vector<1x4xf32>
    %15 = arith.minimumf %14, %13 : vector<1x4xf32>
    %16 = arith.mulf %9, %15 : vector<1x4xf32>
    %cst_13 = arith.constant 0.166666672 : f32
    %17 = vector.broadcast %cst_13 : f32 to vector<1x4xf32>
    %18 = arith.mulf %16, %17 : vector<1x4xf32>
    %19 = vector.shape_cast %18 : vector<1x4xf32> to vector<1x4x1xf32>
    %20 = vector.broadcast %19 : vector<1x4x1xf32> to vector<1x4x256xf32>
    %21 = arith.mulf %0, %20 : vector<1x4x256xf32>
    %c0_14 = arith.constant 0 : index
    %c0_15 = arith.constant 0 : index
    %c0_16 = arith.constant 0 : index
    %22 = vector.load %arg4[%c0_14, %c0_15, %c0_16] : memref<1x4x256xf32, #tpu.memory_space<vmem>>, vector<1x4x256xf32>
    tpu.vector_store %arg4[%c0_14, %c0_15, %c0_16], %21 {strides = array<i32>} : memref<1x4x256xf32, #tpu.memory_space<vmem>>, vector<1x4x256xf32>,
    return
  }
  func.func @transform_0(%arg0: i32) -> (i32, i32, i32) {
    %c0_i32 = arith.constant 0 : i32
    %c0_i32_0 = arith.constant 0 : i32
    %c0_i32_1 = arith.constant 0 : i32
    return %arg0, %c0_i32, %c0_i32_0 : i32, i32, i32
  }
  func.func @transform_1(%arg0: i32) -> (i32, i32) {
    %c0_i32 = arith.constant 0 : i32
    %c0_i32_0 = arith.constant 0 : i32
    %c0_i32_1 = arith.constant 0 : i32
    return %c0_i32, %c0_i32_0 : i32, i32
  }
  func.func @transform_2(%arg0: i32) -> (i32, i32) {
    %c0_i32 = arith.constant 0 : i32
    %c0_i32_0 = arith.constant 0 : i32
    %c0_i32_1 = arith.constant 0 : i32
    return %c0_i32, %c0_i32_0 : i32, i32
  }
  func.func @transform_3(%arg0: i32) -> (i32, i32, i32) {
    %c0_i32 = arith.constant 0 : i32
    %c0_i32_0 = arith.constant 0 : i32
    %c0_i32_1 = arith.constant 0 : i32
    return %arg0, %c0_i32, %c0_i32_0 : i32, i32, i32
  }
}

</mosaic_0001>

<llo_original>
// kernel: tpu_custom_call.1
$region0: #{tpu_custom_call.1}
  #allocation0 [shape = 'u32[]', space=smem, size = 0x4, offset = 0x4, fixed_abs, tag = 'smem constant byte address 0x4 - core index']
  #allocation1 [shape = 'u32[144,128]{1,0:T(1,128)}', space=vmem, size = 0x12000, scoped, tag = 'internal scratch']
  %s0 = inlined_call_operand.hbm [shape: f32[2,4,256], index: 0, kind: input, shape index: {}]
  %s1 = inlined_call_operand.hbm [shape: f32[4,4], index: 1, kind: input, shape index: {}]
  %s2 = inlined_call_operand.vmem [shape: f32[4,4], index: 2, kind: input, shape index: {}]
  %s3 = inlined_call_operand.hbm [shape: f32[2,4,256], index: 3, kind: output, shape index: {}]
  %s4 = sld [smem:[#allocation0]]
  $region53: #{tpu_custom_call.1} parent=0
    _
  %s6 = ssub.s32 1, %s4
  %s7 = scalar_select 0, %s6, %s4
  $region1: #{tpu_custom_call.1} parent=0
    #allocation2 [shape = 'u8[8192]{0}', space=vmem, size = 0x2000, scoped, tag = 'input window, operand 0']
    #allocation3 [shape = 's32[2]{0}', space=sflag, size = 0x8, scoped, tag = 'scoped memory for tpu_custom_call.1']
    #allocation4 [shape = 's32[2]{0}', space=sflag, size = 0x8, scoped, tag = 'scoped memory for tpu_custom_call.1']
    #allocation5 [shape = 'u8[2048]{0}', space=vmem, size = 0x800, scoped, tag = 'input window, operand 1, single buffered']
    #allocation6 [shape = 's32[1]{0}', space=sflag, size = 0x4, scoped, tag = 'scoped memory for tpu_custom_call.1']
    #allocation7 [shape = 'u8[8192]{0}', space=vmem, size = 0x2000, scoped, tag = 'output window, operand 0']
    %8 = vsyncpa [#allocation3], 0
    %s9 = scalar_lea.sflag [#allocation3], 1
    %10 = vsyncpa %s9, 0
    %11 = vsyncpa [#allocation6], 0
    %12 = vsyncpa [#allocation4], 0
    %s13 = scalar_lea.sflag [#allocation4], 1
    %14 = vsyncpa %s13, 0
    loop: start=0, step=1, limit=4
    $region2: #{tpu_custom_call.1} parent=1 // loop_pre_header
      _
    $region3: #{tpu_custom_call.1} parent=1 // loop_header
      %s16 = sphi 0, %s20
      %p17 = scmp.ge.s32.totalorder %s16, 4
      %s26 = sphi 0, %s28
      %s29 = sphi 0, %s26
      %s30 = sphi 0, %s29
      %s46 = sphi 0, %s30
      %s50 = sphi 0, %s50
      %s52 = sphi 0, %s50
      %s53 = sphi 0, %s52
      %s67 = sphi 0, %s53
      %s71 = sphi 0, %s71
      %s73 = sphi 0, %s71
      %s74 = sphi 0, %s73
      %s88 = sphi 0, %s74
      %s94 = sphi 0, %s96
      %s97 = sphi 0, %s94
      %s98 = sphi 0, %s97
      %s114 = sphi 0, %s98
    $region4: #{tpu_custom_call.1} parent=1 // loop_header_branch
      %19 = sbr.rel (%p17) target = $region8
    $region5: #{tpu_custom_call.1} parent=1 // loop_body
      %s21 = ssub.s32 %s16, 1
      %s22 = ssub.s32 %s16, 2
      %s23 = sadd.s32 %s16, 1
      %s24 = ssub.s32 %s16, %s23
      %p25 = scmp.eq.s32.totalorder %s24, 0
      %s27 = sadd.s32 %s26, 1
      %s28 = scalar_select %p25, %s26, %s27
      %p31 = pneg %p25
      %p32 = scmp.eq.s32.totalorder %s16, 1
      %p33 = por %p31, %p32
      %p34 = scmp.ne.s32.totalorder %s26, %s29
      %p35 = scmp.eq.s32.totalorder %s16, 0
      %p36 = por %p34, %p35
      %p37 = scmp.ne.s32.totalorder %s26, %s29
      %p38 = scmp.eq.s32.totalorder %s21, 1
      %p39 = por %p37, %p38
      %p40 = scmp.ne.s32.totalorder %s29, %s30
      %p41 = scmp.eq.s32.totalorder %s21, 0
      %p42 = por %p40, %p41
      %p43 = scmp.ne.s32.totalorder %s29, %s30
      %p44 = scmp.eq.s32.totalorder %s22, 1
      %p45 = por %p43, %p44
      %p47 = scmp.ne.s32.totalorder %s30, %s46
      %p48 = scmp.eq.s32.totalorder %s22, 0
      %p49 = por %p47, %p48
      %s51 = sadd.s32 %s50, 1
      %p54 = scmp.eq.s32.totalorder %s16, 1
      %p55 = scmp.ne.s32.totalorder %s50, %s52
      %p56 = scmp.eq.s32.totalorder %s16, 0
      %p57 = por %p55, %p56
      %p58 = scmp.ne.s32.totalorder %s50, %s52
      %p59 = scmp.eq.s32.totalorder %s21, 1
      %p60 = por %p58, %p59
      %p61 = scmp.ne.s32.totalorder %s52, %s53
      %p62 = scmp.eq.s32.totalorder %s21, 0
      %p63 = por %p61, %p62
      %p64 = scmp.ne.s32.totalorder %s52, %s53
      %p65 = scmp.eq.s32.totalorder %s22, 1
      %p66 = por %p64, %p65
      %p68 = scmp.ne.s32.totalorder %s53, %s67
      %p69 = scmp.eq.s32.totalorder %s22, 0
      %p70 = por %p68, %p69
      %s72 = sadd.s32 %s71, 1
      %p75 = scmp.eq.s32.totalorder %s16, 1
      %p76 = scmp.ne.s32.totalorder %s71, %s73
      %p77 = scmp.eq.s32.totalorder %s16, 0
      %p78 = por %p76, %p77
      %p79 = scmp.ne.s32.totalorder %s71, %s73
      %p80 = scmp.eq.s32.totalorder %s21, 1
      %p81 = por %p79, %p80
      %p82 = scmp.ne.s32.totalorder %s73, %s74
      %p83 = scmp.eq.s32.totalorder %s21, 0
      %p84 = por %p82, %p83
      %p85 = scmp.ne.s32.totalorder %s73, %s74
      %p86 = scmp.eq.s32.totalorder %s22, 1
      %p87 = por %p85, %p86
      %p89 = scmp.ne.s32.totalorder %s74, %s88
      %p90 = scmp.eq.s32.totalorder %s22, 0
      %p91 = por %p89, %p90
      %s92 = ssub.s32 %s16, %s23
      %p93 = scmp.eq.s32.totalorder %s92, 0
      %s95 = sadd.s32 %s94, 1
      %s96 = scalar_select %p93, %s94, %s95
      %p99 = pneg %p93
      %p100 = scmp.eq.s32.totalorder %s16, 1
      %p101 = por %p99, %p100
      %p102 = scmp.ne.s32.totalorder %s94, %s97
      %p103 = scmp.eq.s32.totalorder %s16, 0
      %p104 = por %p102, %p103
      %p105 = scmp.ne.s32.totalorder %s94, %s97
      %p106 = scmp.eq.s32.totalorder %s21, 1
      %p107 = por %p105, %p106
      %p108 = scmp.ne.s32.totalorder %s97, %s98
      %p109 = scmp.eq.s32.totalorder %s21, 0
      %p110 = por %p108, %p109
      %p111 = scmp.ne.s32.totalorder %s97, %s98
      %p112 = scmp.eq.s32.totalorder %s22, 1
      %p113 = por %p111, %p112
      %p115 = scmp.ne.s32.totalorder %s98, %s114
      %p116 = scmp.eq.s32.totalorder %s22, 0
      %p117 = por %p115, %p116
      %p118 = scmp.le.s32.totalorder 1, %s16
      %p119 = scmp.lt.s32.totalorder %s16, 3
      %p120 = pnand %p118, %p119
      %p121 = pneg %p120
      // Predicated region
      $region9: #{tpu_custom_call.1} parent=5 // pred_check
        _
      $region10: #{tpu_custom_call.1} parent=5 // pred_check_branch
        %123 = sbr.rel (%p120) target = $region12
      $region11: #{tpu_custom_call.1} parent=5 // pred_region
        %s124 = ssub.s32 %s16, 1
        // Predicated region
        $region13: #{tpu_custom_call.1} parent=11 // pred_check
          %p125 = pneg %p63
        $region14: #{tpu_custom_call.1} parent=11 // pred_check_branch
          %127 = sbr.rel (%p125) target = $region16
        $region15: #{tpu_custom_call.1} parent=11 // pred_region
          %s129 = ssub.s32 64, 64
          %130 = vsyncadd [#allocation6], %s129
          %s132 = sshll.u32 [#allocation5], 4
          %s133 = int_to_ptr.vmem [resolvable:$true] %s132
          %135 = dma.hbm_to_vmem [thread:$0]  %s1, 64, %s133, [#allocation6]
        $region16: #{tpu_custom_call.1} parent=11 // pred_fallthru
          _
        // Predicated region
        $region17: #{tpu_custom_call.1} parent=11 // pred_check
          %p136 = pneg %p84
        $region18: #{tpu_custom_call.1} parent=11 // pred_check_branch
          %138 = sbr.rel (%p136) target = $region20
        $region19: #{tpu_custom_call.1} parent=11 // pred_region
          _
        $region20: #{tpu_custom_call.1} parent=11 // pred_fallthru
          _
      $region12: #{tpu_custom_call.1} parent=5 // pred_fallthru
        _
      %p139 = scmp.lt.s32.totalorder %s16, 2
      // Predicated region
      $region21: #{tpu_custom_call.1} parent=5 // pred_check
        %p140 = pneg %p139
      $region22: #{tpu_custom_call.1} parent=5 // pred_check_branch
        %142 = sbr.rel (%p140) target = $region24
      $region23: #{tpu_custom_call.1} parent=5 // pred_region
        // Predicated region
        $region25: #{tpu_custom_call.1} parent=23 // pred_check
          %p143 = pneg %p36
        $region26: #{tpu_custom_call.1} parent=23 // pred_check_branch
          %145 = sbr.rel (%p143) target = $region28
        $region27: #{tpu_custom_call.1} parent=23 // pred_region
          %s146 = sand.u32 %s26, 1
          %s147 = scalar_lea.sflag [#allocation3], %s146
          %s148 = sand.u32 %s26, 1
          %s149 = smul.addr %s148, 8
          %s150 = scalar_lea.vmem [#allocation2], %s149
          %s152 = ssub.s32 128, 128
          %153 = vsyncadd %s147, %s152
          %s154 = smul.addr %s16, 2
          %s155 = smul.addr %s154, 64
          %s156 = scalar_lea.hbm %s0, %s155
          %s158 = sshll.u32 %s150, 4
          %s159 = int_to_ptr.vmem [resolvable:$true] %s158
          %161 = dma.hbm_to_vmem [thread:$0]  %s156, 128, %s159, %s147
        $region28: #{tpu_custom_call.1} parent=23 // pred_fallthru
          _
      $region24: #{tpu_custom_call.1} parent=5 // pred_fallthru
        _
      %p162 = scmp.le.s32.totalorder 1, %s16
      %p163 = scmp.lt.s32.totalorder %s16, 3
      %p164 = pnand %p162, %p163
      %p165 = pneg %p164
      // Predicated region
      $region29: #{tpu_custom_call.1} parent=5 // pred_check
        _
      $region30: #{tpu_custom_call.1} parent=5 // pred_check_branch
        %167 = sbr.rel (%p164) target = $region32
      $region31: #{tpu_custom_call.1} parent=5 // pred_region
        %s168 = ssub.s32 %s16, 1
        %s169 = sand.u32 %s29, 1
        %s170 = scalar_lea.sflag [#allocation3], %s169
        %s171 = sand.u32 %s29, 1
        %s172 = smul.addr %s171, 8
        %s173 = scalar_lea.vmem [#allocation2], %s172
        // Predicated region
        $region33: #{tpu_custom_call.1} parent=31 // pred_check
          %p174 = pneg %p42
        $region34: #{tpu_custom_call.1} parent=31 // pred_check_branch
          %176 = sbr.rel (%p174) target = $region36
        $region35: #{tpu_custom_call.1} parent=31 // pred_region
          %177 = dma.done %s170, 128
        $region36: #{tpu_custom_call.1} parent=31 // pred_fallthru
          _
        // Predicated region
        $region37: #{tpu_custom_call.1} parent=31 // pred_check
          %p178 = pneg %p63
        $region38: #{tpu_custom_call.1} parent=31 // pred_check_branch
          %180 = sbr.rel (%p178) target = $region40
        $region39: #{tpu_custom_call.1} parent=31 // pred_region
          %181 = dma.done [#allocation6], 64
        $region40: #{tpu_custom_call.1} parent=31 // pred_fallthru
          _
        %s182 = sand.u32 %s29, 1
        %s183 = scalar_lea.sflag [#allocation3], %s182
        %s184 = sand.u32 %s29, 1
        %s185 = smul.addr %s184, 8
        %s186 = scalar_lea.vmem [#allocation2], %s185
        %p187 = pneg %p42
        %p188 = pneg %p39
        %p189 = pneg %p63
        %p190 = pneg %p60
        %p191 = pneg %p84
        %p192 = pneg %p81
        %p193 = pneg %p110
        %p194 = pneg %p107
        %s195 = sand.u32 %s97, 1
        %s196 = scalar_lea.sflag [#allocation4], %s195
        %s197 = sand.u32 %s97, 1
        %s198 = smul.addr %s197, 8
        %s199 = scalar_lea.vmem [#allocation7], %s198
        %v200 = vld [vmem:[%s173] sm:$0xff]
        %v202 = vcombine.high %v200, %v200
        %vm204 = vcmask 1043456
        %v205 = vsel %vm204, %v200, 0.0
        %v206 = vsel %vm204, %v202, 0.0
        %v207 = vadd.f32 %v205, %v206
        %208 = vadd.xlane.f32.xlu0 %v207
        %v209 = vpop.xlane.xlu0 %208
        %v210 = vrcp.pop 256.0
        %v211 = vmul.f32 %v209, %v210
        %v212 = vld [vmem:[#allocation5] sm:$0xf]
        %v214 = vlaneseq
        %v215 = vand.u32 %v214, 127
        %v216 = vlaneseq
        %v217 = vshrl.u32 %v216, 7
        %v218 = vsub.s32 %v215, %v217
        %v219 = vrot.slane %v211, %v218
        %vm220 = vcmask 31744
        %v221 = vsel %vm220, %v219, 0
        %v224 = vsel %vm204, %v212, 0
        %226 = vmatprep.subr.mxu0 0.0
        %227 = vmatpush1.msra.mxu0 %v224
        %228 = vmatprep.subr.mxu0 0.0
        %229 = vmatpush1.msra.mxu0 0.0
        %230 = vmatprep.subr.mxu0 0.0
        %231 = vmatpush1.msra.mxu0 0.0
        %232 = vmatprep.subr.mxu0 0.0
        %233 = vmatpush1.msra.mxu0 0.0
        %234 = vmatprep.subr.mxu0 0.0
        %235 = vmatpush1.msra.mxu0 0.0
        %236 = vmatprep.subr.mxu0 0.0
        %237 = vmatpush1.msra.mxu0 0.0
        %238 = vmatprep.subr.mxu0 0.0
        %239 = vmatpush1.msra.mxu0 0.0
        %240 = vmatprep.subr.mxu0 0.0
        %241 = vmatpush1.msra.mxu0 0.0
        %242 = vmatprep.subr.mxu0 0.0
        %243 = vmatpush1.msra.mxu0 0.0
        %244 = vmatprep.subr.mxu0 0.0
        %245 = vmatpush1.msra.mxu0 0.0
        %246 = vmatprep.subr.mxu0 0.0
        %247 = vmatpush1.msra.mxu0 0.0
        %248 = vmatprep.subr.mxu0 0.0
        %249 = vmatpush1.msra.mxu0 0.0
        %250 = vmatprep.subr.mxu0 0.0
        %251 = vmatpush1.msra.mxu0 0.0
        %252 = vmatprep.subr.mxu0 0.0
        %253 = vmatpush1.msra.mxu0 0.0
        %254 = vmatprep.subr.mxu0 0.0
        %255 = vmatpush1.msra.mxu0 0.0
        %256 = vmatprep.subr.mxu0 0.0
        %257 = vmatpush1.msra.mxu0 0.0
        %258 = vmatprep.subr.mxu0 0.0
        %259 = vmatpush1.msra.mxu0 0.0
        %260 = vmatprep.subr.mxu0 0.0
        %261 = vmatpush1.msra.mxu0 0.0
        %262 = vmatprep.subr.mxu0 0.0
        %263 = vmatpush1.msra.mxu0 0.0
        %264 = vmatprep.subr.mxu0 0.0
        %265 = vmatpush1.msra.mxu0 0.0
        %266 = vmatprep.subr.mxu0 0.0
        %267 = vmatpush1.msra.mxu0 0.0
        %268 = vmatprep.subr.mxu0 0.0
        %269 = vmatpush1.msra.mxu0 0.0
        %270 = vmatprep.subr.mxu0 0.0
        %271 = vmatpush1.msra.mxu0 0.0
        %272 = vmatprep.subr.mxu0 0.0
        %273 = vmatpush1.msra.mxu0 0.0
        %274 = vmatprep.subr.mxu0 0.0
        %275 = vmatpush1.msra.mxu0 0.0
        %276 = vmatprep.subr.mxu0 0.0
        %277 = vmatpush1.msra.mxu0 0.0
        %278 = vmatprep.subr.mxu0 0.0
        %279 = vmatpush1.msra.mxu0 0.0
        %280 = vmatprep.subr.mxu0 0.0
        %281 = vmatpush1.msra.mxu0 0.0
        %282 = vmatprep.subr.mxu0 0.0
        %283 = vmatpush1.msra.mxu0 0.0
        %284 = vmatprep.subr.mxu0 0.0
        %285 = vmatpush1.msra.mxu0 0.0
        %286 = vmatprep.subr.mxu0 0.0
        %287 = vmatpush1.msra.mxu0 0.0
        %288 = vmatprep.subr.mxu0 0.0
        %289 = vmatpush1.msra.mxu0 0.0
        %290 = vmatprep.mubr.f32.mxu0 0.0
        %291 = vmatmul.mubr.f32.gmra.mrb[0].mxu0 %v221
        %v292 = vpop.f32.mrb[0].mxu0
        %v293 = vadd.f32 0.0, %v292
        %v294 = vpop.f32.mrb[0].mxu0
        %295 = vdwg.mxu0
        %v296 = vmax.f32 %v293, 0.0
        %v297 = vld [vmem:[%s2] sm:$0xf]
        %v299 = vsel %vm220, %v296, 0
        %v302 = vsel %vm204, %v297, 0
        %304 = vmatprep.subr.mxu0 0.0
        %305 = vmatpush1.msra.mxu0 %v302
        %306 = vmatprep.subr.mxu0 0.0
        %307 = vmatpush1.msra.mxu0 0.0
        %308 = vmatprep.subr.mxu0 0.0
        %309 = vmatpush1.msra.mxu0 0.0
        %310 = vmatprep.subr.mxu0 0.0
        %311 = vmatpush1.msra.mxu0 0.0
        %312 = vmatprep.subr.mxu0 0.0
        %313 = vmatpush1.msra.mxu0 0.0
        %314 = vmatprep.subr.mxu0 0.0
        %315 = vmatpush1.msra.mxu0 0.0
        %316 = vmatprep.subr.mxu0 0.0
        %317 = vmatpush1.msra.mxu0 0.0
        %318 = vmatprep.subr.mxu0 0.0
        %319 = vmatpush1.msra.mxu0 0.0
        %320 = vmatprep.subr.mxu0 0.0
        %321 = vmatpush1.msra.mxu0 0.0
        %322 = vmatprep.subr.mxu0 0.0
        %323 = vmatpush1.msra.mxu0 0.0
        %324 = vmatprep.subr.mxu0 0.0
        %325 = vmatpush1.msra.mxu0 0.0
        %326 = vmatprep.subr.mxu0 0.0
        %327 = vmatpush1.msra.mxu0 0.0
        %328 = vmatprep.subr.mxu0 0.0
        %329 = vmatpush1.msra.mxu0 0.0
        %330 = vmatprep.subr.mxu0 0.0
        %331 = vmatpush1.msra.mxu0 0.0
        %332 = vmatprep.subr.mxu0 0.0
        %333 = vmatpush1.msra.mxu0 0.0
        %334 = vmatprep.subr.mxu0 0.0
        %335 = vmatpush1.msra.mxu0 0.0
        %336 = vmatprep.subr.mxu0 0.0
        %337 = vmatpush1.msra.mxu0 0.0
        %338 = vmatprep.subr.mxu0 0.0
        %339 = vmatpush1.msra.mxu0 0.0
        %340 = vmatprep.subr.mxu0 0.0
        %341 = vmatpush1.msra.mxu0 0.0
        %342 = vmatprep.subr.mxu0 0.0
        %343 = vmatpush1.msra.mxu0 0.0
        %344 = vmatprep.subr.mxu0 0.0
        %345 = vmatpush1.msra.mxu0 0.0
        %346 = vmatprep.subr.mxu0 0.0
        %347 = vmatpush1.msra.mxu0 0.0
        %348 = vmatprep.subr.mxu0 0.0
        %349 = vmatpush1.msra.mxu0 0.0
        %350 = vmatprep.subr.mxu0 0.0
        %351 = vmatpush1.msra.mxu0 0.0
        %352 = vmatprep.subr.mxu0 0.0
        %353 = vmatpush1.msra.mxu0 0.0
        %354 = vmatprep.subr.mxu0 0.0
        %355 = vmatpush1.msra.mxu0 0.0
        %356 = vmatprep.subr.mxu0 0.0
        %357 = vmatpush1.msra.mxu0 0.0
        %358 = vmatprep.subr.mxu0 0.0
        %359 = vmatpush1.msra.mxu0 0.0
        %360 = vmatprep.subr.mxu0 0.0
        %361 = vmatpush1.msra.mxu0 0.0
        %362 = vmatprep.subr.mxu0 0.0
        %363 = vmatpush1.msra.mxu0 0.0
        %364 = vmatprep.subr.mxu0 0.0
        %365 = vmatpush1.msra.mxu0 0.0
        %366 = vmatprep.subr.mxu0 0.0
        %367 = vmatpush1.msra.mxu0 0.0
        %368 = vmatprep.mubr.f32.mxu0 0.0
        %369 = vmatmul.mubr.f32.gmra.mrb[0].mxu0 %v299
        %v370 = vpop.f32.mrb[0].mxu0
        %v371 = vadd.f32 0.0, %v370
        %v372 = vpop.f32.mrb[0].mxu0
        %373 = vdwg.mxu0
        %v374 = vadd.f32 %v371, 3.0
        %v375 = vmax.f32 %v374, 0.0
        %v376 = vmin.f32 %v375, 6.0
        %v377 = vmul.f32 %v371, %v376
        %v378 = vmul.f32 %v377, 0.16666667
        %v379 = vlaneseq
        %v380 = vshrl.u32 %v379, 7
        %v381 = vsub.s32 0, %v380
        %v382 = vrot.slane %v378, %v381
        %384 = vbcast.lane.b32.xlu0 %v382, 256
        %v385 = vpop.permute.xlu0 %384
        %v388 = vunpack.c.l.s4 839922192
        %v389 = vunpack.c.0.s8 %v388
        %v390 = vlaneseq
        %v391 = vshrl.u32 %v390, 7
        %v392 = vsub.s32 %v389, %v391
        %v393 = vrot.slane %v385, %v392
        %v395 = vmul.f32 %v200, %v393
        %396 = vst [vmem:[%s199] sm:$0xff] %v395
        %s397 = sand.u32 %s97, 1
        %s398 = scalar_lea.sflag [#allocation4], %s397
        %s399 = sand.u32 %s97, 1
        %s400 = smul.addr %s399, 8
        %s401 = scalar_lea.vmem [#allocation7], %s400
        // Predicated region
        $region41: #{tpu_custom_call.1} parent=31 // pred_check
          %p402 = pneg %p107
        $region42: #{tpu_custom_call.1} parent=31 // pred_check_branch
          %404 = sbr.rel (%p402) target = $region44
        $region43: #{tpu_custom_call.1} parent=31 // pred_region
          %s406 = ssub.s32 128, 128
          %407 = vsyncadd %s398, %s406
          %s408 = smul.addr %s21, 2
          %s409 = smul.addr %s408, 64
          %s410 = scalar_lea.hbm %s3, %s409
          %s412 = sshll.u32 %s401, 4
          %s413 = int_to_ptr.vmem [resolvable:$true] %s412
          %415 = dma.vmem_to_hbm [thread:$0]  %s413, 128, %s410, %s398
        $region44: #{tpu_custom_call.1} parent=31 // pred_fallthru
          _
      $region32: #{tpu_custom_call.1} parent=5 // pred_fallthru
        _
      %p416 = scmp.le.s32.totalorder 2, %s16
      // Predicated region
      $region45: #{tpu_custom_call.1} parent=5 // pred_check
        %p417 = pneg %p416
      $region46: #{tpu_custom_call.1} parent=5 // pred_check_branch
        %419 = sbr.rel (%p417) target = $region48
      $region47: #{tpu_custom_call.1} parent=5 // pred_region
        %s420 = ssub.s32 %s16, 2
        // Predicated region
        $region49: #{tpu_custom_call.1} parent=47 // pred_check
          %p421 = pneg %p113
        $region50: #{tpu_custom_call.1} parent=47 // pred_check_branch
          %423 = sbr.rel (%p421) target = $region52
        $region51: #{tpu_custom_call.1} parent=47 // pred_region
          %s424 = sand.u32 %s98, 1
          %s425 = scalar_lea.sflag [#allocation4], %s424
          %s426 = sand.u32 %s98, 1
          %s427 = smul.addr %s426, 8
          %s428 = scalar_lea.vmem [#allocation7], %s427
          %429 = dma.done %s425, 128
        $region52: #{tpu_custom_call.1} parent=47 // pred_fallthru
          _
      $region48: #{tpu_custom_call.1} parent=5 // pred_fallthru
        _
    $region6: #{tpu_custom_call.1} parent=1 // loop_footer
      %s20 = sadd.s32 1, %s16
    $region7: #{tpu_custom_call.1} parent=1 // loop_footer_branch
      %15 = sbr.rel target = $region3
    $region8: #{tpu_custom_call.1} parent=1 // loop_exit
      _
    %430 = vsyncpa [#allocation3], 1
    %s431 = scalar_lea.sflag [#allocation3], 1
    %432 = vsyncpa %s431, 1
    %433 = vsyncpa [#allocation6], 1
    %434 = vsyncpa [#allocation4], 1
    %s435 = scalar_lea.sflag [#allocation4], 1
    %436 = vsyncpa %s435, 1

</llo_original>
